<compile_context>
chip_gen: v5e
topology: v5e:2x2
jax: 0.10.0
libtpu: 0.0.40
codegen_flags: <defaults>
</compile_context>

<pallas_src>
import functools

import jax
import jax.numpy as jnp
from jax.experimental import pallas as pl
from jax.experimental.pallas import tpu as pltpu

_LANE = 128
_SUBLANE_BF16 = 16
_TB_MAX = 1024
_NEG_BIG = -1e30  # bias for padded action columns; can never win an argmax


def _round_up(x, m):
    return (x + m - 1) // m * m


# ----------------------------------------------------------------------------
# Kernels
# ----------------------------------------------------------------------------
def _compute_logits_f32(x_ref, w1_ref, b1_ref, w2_ref, b2_ref):
    # x: bf16 [TB, S]   w1: bf16 [S, H]   b1: f32 [1, H]
    # w2: bf16 [H, A_pad]   b2: f32 [1, A_pad]   ->   f32 [TB, A_pad]
    h = jnp.dot(x_ref[...], w1_ref[...], preferred_element_type=jnp.float32)
    h = jnp.maximum(h + b1_ref[...], 0.0)                       # bias + ReLU in f32
    logits = jnp.dot(h.astype(jnp.bfloat16), w2_ref[...],
                     preferred_element_type=jnp.float32)
    return logits + b2_ref[...]


def _routing_logits_kernel(x_ref, w1_ref, b1_ref, w2_ref, b2_ref, o_ref):
    # f32 accumulation, bf16 store (halves the logits HBM writeback).
    o_ref[...] = _compute_logits_f32(
        x_ref, w1_ref, b1_ref, w2_ref, b2_ref).astype(o_ref.dtype)


def _routing_argmax_kernel(x_ref, w1_ref, b1_ref, w2_ref, b2_ref, a_ref):
    logits = _compute_logits_f32(x_ref, w1_ref, b1_ref, w2_ref, b2_ref)
    col = jax.lax.broadcasted_iota(jnp.int32, logits.shape, 1)
    row_max = jnp.max(logits, axis=-1, keepdims=True)
    cand = jnp.where(logits == row_max, col, jnp.int32(2**31 - 1))
    # smallest index among maxima == jnp.argmax tie-break
    a_ref[...] = jnp.min(cand, axis=-1, keepdims=True)


# ----------------------------------------------------------------------------
# Wrapper plumbing
# ----------------------------------------------------------------------------
def prepare_params(w1, b1, w2, b2):
    """One-time cast/pad of the routing-head parameters (cache the result)."""
    state_dim, hidden_dim = w1.shape
    num_actions = w2.shape[1]
    a_pad = _round_up(num_actions, _LANE)

    w1b = w1.astype(jnp.bfloat16)
    b1f = jnp.asarray(b1, jnp.float32).reshape(1, hidden_dim)
    w2b = jnp.zeros((hidden_dim, a_pad), jnp.bfloat16)
    w2b = w2b.at[:, :num_actions].set(w2.astype(jnp.bfloat16))
    b2f = jnp.full((1, a_pad), _NEG_BIG, jnp.float32)
    b2f = b2f.at[:, :num_actions].set(
        jnp.asarray(b2, jnp.float32).reshape(1, num_actions))
    params = (w1b, b1f, w2b, b2f)
    return params, num_actions


def _batch_tiling(batch):
    """Pick (tile_rows, padded_batch) with minimal padding and >=2 grid steps
    whenever batch > one bf16 sublane pack (so v7x's 2nd TensorCore is used)."""
    b16 = _round_up(batch, _SUBLANE_BF16)
    if b16 <= _SUBLANE_BF16:
        return b16, b16
    tb = min(_TB_MAX, _round_up(pl.cdiv(b16, 2), _SUBLANE_BF16))
    b_pad = _round_up(batch, tb)
    return tb, b_pad


def _in_specs(tb, state_dim, hidden_dim, a_pad):
    return [
        pl.BlockSpec((tb, state_dim), lambda i: (i, 0)),          # x tile (streamed)
        pl.BlockSpec((state_dim, hidden_dim), lambda i: (0, 0)),  # w1 (resident)
        pl.BlockSpec((1, hidden_dim), lambda i: (0, 0)),          # b1 (resident)
        pl.BlockSpec((hidden_dim, a_pad), lambda i: (0, 0)),      # w2 (resident)
        pl.BlockSpec((1, a_pad), lambda i: (0, 0)),               # b2 (resident)
    ]


def _compiler_params(tb, state_dim, hidden_dim, a_pad, out_block_bytes):
    # Accurate VMEM budget: double-buffered I/O blocks + (double-buffered)
    # resident params + f32 intermediates + fixed headroom for Mosaic scratch.
    io = 2 * (tb * state_dim * 2 + out_block_bytes)
    weights = 2 * (state_dim * hidden_dim * 2 + hidden_dim * 4
                   + hidden_dim * a_pad * 2 + a_pad * 4)
    interm = tb * hidden_dim * 4 + tb * a_pad * 4
    vmem_limit = int(min(max(io + weights + interm + (4 << 20), 8 << 20), 56 << 20))
    return pltpu.CompilerParams(
        dimension_semantics=("parallel",),
        vmem_limit_bytes=vmem_limit,
    )


def _cost(b_pad, state_dim, hidden_dim, a_pad, out_bytes):
    flops = 2 * b_pad * (state_dim * hidden_dim + hidden_dim * a_pad)
    bytes_accessed = (b_pad * state_dim * 2                          # x (bf16)
                      + state_dim * hidden_dim * 2 + hidden_dim * 4  # w1, b1
                      + hidden_dim * a_pad * 2 + a_pad * 4           # w2, b2
                      + out_bytes)
    return pl.CostEstimate(flops=flops, transcendentals=0,
                           bytes_accessed=bytes_accessed)


# ----------------------------------------------------------------------------
# Public API (mirrors forward / select_action of the routing model)
# ----------------------------------------------------------------------------
@functools.partial(jax.jit, static_argnames=("num_actions",))
def routing_forward(state, params, *, num_actions):
    """Fused 2-layer MLP routing head: relu(state@W1+b1)@W2+b2 -> bf16 logits."""
    w1b, b1f, w2b, b2f = params
    batch, state_dim = state.shape
    hidden_dim = w1b.shape[1]
    a_pad = w2b.shape[1]
    tb, b_pad = _batch_tiling(batch)
    x = jnp.pad(state.astype(jnp.bfloat16), ((0, b_pad - batch), (0, 0)))
    logits_pad = pl.pallas_call(
        _routing_logits_kernel,
        out_shape=jax.ShapeDtypeStruct((b_pad, a_pad), jnp.bfloat16),
        grid=(b_pad // tb,),
        in_specs=_in_specs(tb, state_dim, hidden_dim, a_pad),
        out_specs=pl.BlockSpec((tb, a_pad), lambda i: (i, 0)),
        compiler_params=_compiler_params(tb, state_dim, hidden_dim, a_pad,
                                         tb * a_pad * 2),
        cost_estimate=_cost(b_pad, state_dim, hidden_dim, a_pad, b_pad * a_pad * 2),
    )(x, w1b, b1f, w2b, b2f)
    return logits_pad[:batch, :num_actions]


@jax.jit
def select_action(state, params):
    """Greedy action selection; the argmax is fused into the kernel."""
    w1b, b1f, w2b, b2f = params
    batch, state_dim = state.shape
    hidden_dim = w1b.shape[1]
    a_pad = w2b.shape[1]
    tb, b_pad = _batch_tiling(batch)
    x = jnp.pad(state.astype(jnp.bfloat16), ((0, b_pad - batch), (0, 0)))
    actions = pl.pallas_call(
        _routing_argmax_kernel,
        out_shape=jax.ShapeDtypeStruct((b_pad, 1), jnp.int32),
        grid=(b_pad // tb,),
        in_specs=_in_specs(tb, state_dim, hidden_dim, a_pad),
        out_specs=pl.BlockSpec((tb, 1), lambda i: (i, 0)),
        compiler_params=_compiler_params(tb, state_dim, hidden_dim, a_pad, tb * 4),
        cost_estimate=_cost(b_pad, state_dim, hidden_dim, a_pad, b_pad * 4),
    )(x, w1b, b1f, w2b, b2f)
    return actions[:batch, 0]


def init_params(key, state_dim, hidden_dim, num_actions):
    k1, k2 = jax.random.split(key)
    w1 = jax.random.normal(k1, (state_dim, hidden_dim), jnp.float32) * 0.1
    b1 = jnp.zeros((1, hidden_dim), jnp.float32)
    w2 = jax.random.normal(k2, (hidden_dim, num_actions), jnp.float32) * 0.1
    b2 = jnp.zeros((1, num_actions), jnp.float32)
    return w1, b1, w2, b2


if __name__ == "__main__":
    key = jax.random.PRNGKey(0)
    k_state, k_params = jax.random.split(key)

    batch, state_dim, hidden_dim, num_actions = 2, 16, 32, 8
    state = jax.random.normal(k_state, (batch, state_dim), jnp.float32)
    w1, b1, w2, b2 = init_params(k_params, state_dim, hidden_dim, num_actions)

    # One-time parameter prep (cached across calls).
    params, n_act = prepare_params(w1, b1, w2, b2)

    logits = jax.block_until_ready(routing_forward(state, params, num_actions=n_act))
    assert logits.shape == (batch, num_actions)
    assert logits.dtype == jnp.bfloat16

    # Correctness check against a pure-JAX f32 reference (bf16 matmul/store tol).
    ref = jnp.maximum(state @ w1 + b1, 0.0) @ w2 + b2
    assert jnp.allclose(logits.astype(jnp.float32), ref, atol=2e-2, rtol=2e-2), \
        "Pallas logits mismatch"

    actions = jax.block_until_ready(select_action(state, params))
    assert actions.shape == (batch,)
    assert actions.dtype == jnp.int32
    assert bool(jnp.all((actions >= 0) & (actions < num_actions)))
    # Tie-robust argmax check: the chosen action attains the row maximum.
    l32 = logits.astype(jnp.float32)
    picked = jnp.take_along_axis(l32, actions[:, None], axis=1)[:, 0]
    assert bool(jnp.all(picked == jnp.max(l32, axis=-1))), "argmax mismatch"

    print("KERNEL_OK")
</pallas_src>

<mosaic_0001>
module attributes {stable_mosaic.version = 11 : i64} {
  func.func @_routing_logits_kernel(%arg0: i32, %arg1: memref<16x16xbf16, #tpu.memory_space<vmem>>, %arg2: memref<16x32xbf16, #tpu.memory_space<vmem>>, %arg3: memref<1x32xf32, #tpu.memory_space<vmem>>, %arg4: memref<32x128xbf16, #tpu.memory_space<vmem>>, %arg5: memref<1x128xf32, #tpu.memory_space<vmem>>, %arg6: memref<16x128xbf16, #tpu.memory_space<vmem>>) attributes {dimension_semantics = [#tpu.dimension_semantics<parallel>], iteration_bounds = array<i64: 1>, scalar_prefetch = 0 : i64, scratch_operands = 0 : i64, tpu.core_type = #tpu.core_type<tc>, window_params = [{transform_indices = @transform_0, window_bounds = array<i64: 16, 16>}, {pipeline_mode = #tpu.pipeline_mode<synchronous>, transform_indices = @transform_1, window_bounds = array<i64: 16, 32>}, {pipeline_mode = #tpu.pipeline_mode<synchronous>, transform_indices = @transform_2, window_bounds = array<i64: 1, 32>}, {pipeline_mode = #tpu.pipeline_mode<synchronous>, transform_indices = @transform_3, window_bounds = array<i64: 32, 128>}, {pipeline_mode = #tpu.pipeline_mode<synchronous>, transform_indices = @transform_4, window_bounds = array<i64: 1, 128>}, {transform_indices = @transform_5, window_bounds = array<i64: 16, 128>}]} {
    %c0 = arith.constant 0 : index
    %c0_0 = arith.constant 0 : index
    %0 = vector.load %arg1[%c0, %c0_0] : memref<16x16xbf16, #tpu.memory_space<vmem>>, vector<16x16xbf16>
    %c0_1 = arith.constant 0 : index
    %c0_2 = arith.constant 0 : index
    %1 = vector.load %arg2[%c0_1, %c0_2] : memref<16x32xbf16, #tpu.memory_space<vmem>>, vector<16x32xbf16>
    %cst = arith.constant dense<0.000000e+00> : vector<16x32xf32>
    %2 = tpu.matmul %0, %1, %cst {dimension_numbers = #tpu.dot_dimension_numbers<[1], [0], [0], [1], [0, 0, 1, 1], [], []>} : vector<16x16xbf16>, vector<16x32xbf16>, vector<16x32xf32> -> vector<16x32xf32>
    %c0_3 = arith.constant 0 : index
    %c0_4 = arith.constant 0 : index
    %3 = vector.load %arg3[%c0_3, %c0_4] : memref<1x32xf32, #tpu.memory_space<vmem>>, vector<1x32xf32>
    %4 = vector.broadcast %3 : vector<1x32xf32> to vector<16x32xf32>
    %5 = arith.addf %2, %4 : vector<16x32xf32>
    %cst_5 = arith.constant 0.000000e+00 : f32
    %6 = vector.broadcast %cst_5 : f32 to vector<16x32xf32>
    %7 = arith.maximumf %5, %6 : vector<16x32xf32>
    %8 = arith.truncf %7 : vector<16x32xf32> to vector<16x32xbf16>
    %c0_6 = arith.constant 0 : index
    %c0_7 = arith.constant 0 : index
    %9 = vector.load %arg4[%c0_6, %c0_7] : memref<32x128xbf16, #tpu.memory_space<vmem>>, vector<32x128xbf16>
    %cst_8 = arith.constant dense<0.000000e+00> : vector<16x128xf32>
    %10 = tpu.matmul %8, %9, %cst_8 {dimension_numbers = #tpu.dot_dimension_numbers<[1], [0], [0], [1], [0, 0, 1, 1], [], []>} : vector<16x32xbf16>, vector<32x128xbf16>, vector<16x128xf32> -> vector<16x128xf32>
    %c0_9 = arith.constant 0 : index
    %c0_10 = arith.constant 0 : index
    %11 = vector.load %arg5[%c0_9, %c0_10] : memref<1x128xf32, #tpu.memory_space<vmem>>, vector<1x128xf32>
    %12 = vector.broadcast %11 : vector<1x128xf32> to vector<16x128xf32>
    %13 = arith.addf %10, %12 : vector<16x128xf32>
    %14 = arith.truncf %13 : vector<16x128xf32> to vector<16x128xbf16>
    %c0_11 = arith.constant 0 : index
    %c0_12 = arith.constant 0 : index
    %15 = vector.load %arg6[%c0_11, %c0_12] : memref<16x128xbf16, #tpu.memory_space<vmem>>, vector<16x128xbf16>
    tpu.vector_store %arg6[%c0_11, %c0_12], %14 {strides = array<i32>} : memref<16x128xbf16, #tpu.memory_space<vmem>>, vector<16x128xbf16>,
    return
  }
  func.func @transform_0(%arg0: i32) -> (i32, i32) {
    %c0_i32 = arith.constant 0 : i32
    %c0_i32_0 = arith.constant 0 : i32
    return %arg0, %c0_i32 : i32, i32
  }
  func.func @transform_1(%arg0: i32) -> (i32, i32) {
    %c0_i32 = arith.constant 0 : i32
    %c0_i32_0 = arith.constant 0 : i32
    %c0_i32_1 = arith.constant 0 : i32
    return %c0_i32, %c0_i32_0 : i32, i32
  }
  func.func @transform_2(%arg0: i32) -> (i32, i32) {
    %c0_i32 = arith.constant 0 : i32
    %c0_i32_0 = arith.constant 0 : i32
    %c0_i32_1 = arith.constant 0 : i32
    return %c0_i32, %c0_i32_0 : i32, i32
  }
  func.func @transform_3(%arg0: i32) -> (i32, i32) {
    %c0_i32 = arith.constant 0 : i32
    %c0_i32_0 = arith.constant 0 : i32
    %c0_i32_1 = arith.constant 0 : i32
    return %c0_i32, %c0_i32_0 : i32, i32
  }
  func.func @transform_4(%arg0: i32) -> (i32, i32) {
    %c0_i32 = arith.constant 0 : i32
    %c0_i32_0 = arith.constant 0 : i32
    %c0_i32_1 = arith.constant 0 : i32
    return %c0_i32, %c0_i32_0 : i32, i32
  }
  func.func @transform_5(%arg0: i32) -> (i32, i32) {
    %c0_i32 = arith.constant 0 : i32
    %c0_i32_0 = arith.constant 0 : i32
    return %arg0, %c0_i32 : i32, i32
  }
}

</mosaic_0001>

<llo_original>
// kernel: routing_forward.1
$region0: #{routing_forward.1}
  #allocation0 [shape = 'u32[]', space=smem, size = 0x4, offset = 0x4, fixed_abs, tag = 'smem constant byte address 0x4 - core index']
  #allocation1 [shape = 'u32[72,128]{1,0:T(1,128)}', space=vmem, size = 0x9000, scoped, tag = 'internal scratch']
  %s0 = inlined_call_operand.vmem [shape: bf16[16,16], index: 0, kind: input, shape index: {}]
  %s1 = inlined_call_operand.vmem [shape: bf16[16,32], index: 1, kind: input, shape index: {}]
  %s2 = inlined_call_operand.vmem [shape: f32[1,32], index: 2, kind: input, shape index: {}]
  %s3 = inlined_call_operand.hbm [shape: bf16[32,128], index: 3, kind: input, shape index: {}]
  %s4 = inlined_call_operand.vmem [shape: f32[1,128], index: 4, kind: input, shape index: {}]
  %s5 = inlined_call_operand.vmem [shape: bf16[16,128], index: 5, kind: output, shape index: {}]
  %s6 = sld [smem:[#allocation0]]
  $region34: #{routing_forward.1} parent=0
    _
  %s8 = ssub.s32 1, %s6
  %s9 = scalar_select 0, %s8, %s6
  $region1: #{routing_forward.1} parent=0
    #allocation2 [shape = 'u8[8192]{0}', space=vmem, size = 0x2000, scoped, tag = 'input window, operand 3, single buffered']
    #allocation3 [shape = 's32[1]{0}', space=sflag, size = 0x4, scoped, tag = 'scoped memory for routing_forward.1']
    %10 = vsyncpa [#allocation3], 0
    // Predicated region
    $region2: #{routing_forward.1} parent=1 // pred_check
      _
    $region3: #{routing_forward.1} parent=1 // pred_check_branch
      %12 = sbr.rel (0) target = $region5
    $region4: #{routing_forward.1} parent=1 // pred_region
      _
    $region5: #{routing_forward.1} parent=1 // pred_fallthru
      _
    // Predicated region
    $region6: #{routing_forward.1} parent=1 // pred_check
      _
    $region7: #{routing_forward.1} parent=1 // pred_check_branch
      %14 = sbr.rel (0) target = $region9
    $region8: #{routing_forward.1} parent=1 // pred_region
      _
    $region9: #{routing_forward.1} parent=1 // pred_fallthru
      _
    // Predicated region
    $region10: #{routing_forward.1} parent=1 // pred_check
      _
    $region11: #{routing_forward.1} parent=1 // pred_check_branch
      %16 = sbr.rel (0) target = $region13
    $region12: #{routing_forward.1} parent=1 // pred_region
      _
    $region13: #{routing_forward.1} parent=1 // pred_fallthru
      _
    // Predicated region
    $region14: #{routing_forward.1} parent=1 // pred_check
      _
    $region15: #{routing_forward.1} parent=1 // pred_check_branch
      %18 = sbr.rel (0) target = $region17
    $region16: #{routing_forward.1} parent=1 // pred_region
      %20 = vsyncadd [#allocation3], 0
      %s21 = sshll.u32 %s3, 4
      %s22 = int_to_ptr.hbm [resolvable:$true] %s21
      %s23 = sshll.u32 [#allocation2], 4
      %s24 = int_to_ptr.vmem [resolvable:$true] %s23
      %29 = dma.hbm_to_vmem [thread:$0]  %s22, 256, %s24, [#allocation3], 64, 64, 4
    $region17: #{routing_forward.1} parent=1 // pred_fallthru
      _
    // Predicated region
    $region18: #{routing_forward.1} parent=1 // pred_check
      _
    $region19: #{routing_forward.1} parent=1 // pred_check_branch
      %31 = sbr.rel (0) target = $region21
    $region20: #{routing_forward.1} parent=1 // pred_region
      _
    $region21: #{routing_forward.1} parent=1 // pred_fallthru
      _
    // Predicated region
    $region22: #{routing_forward.1} parent=1 // pred_check
      _
    $region23: #{routing_forward.1} parent=1 // pred_check_branch
      %33 = sbr.rel (0) target = $region25
    $region24: #{routing_forward.1} parent=1 // pred_region
      %35 = dma.done [#allocation3], 256
    $region25: #{routing_forward.1} parent=1 // pred_fallthru
      _
    %v37 = vld [vmem:[%s0] sm:$0xf]
    %v38 = vld [vmem:[%s0 + $0x4] sm:$0xf]
    %v39 = vld [vmem:[%s1] sm:$0xf]
    %v40 = vld [vmem:[%s1 + $0x4] sm:$0xf]
    %v41 = vld [vmem:[%s2] sm:$0x1]
    %v43 = vperm.slane %v41, 0
    %v47 = vunpack.c.l.b16 %v37
    %v48 = vunpack.c.l.b16 %v38
    %v49 = vpack.c.b16 %v48, %v47
    %v52 = vunpack.c.l.b16 %v39
    %v53 = vunpack.c.l.b16 %v40
    %v54 = vpack.c.b16 %v53, %v52
    %vm56 = vcmask 130048
    %v58 = vsel %vm56, %v49, 0
    %60 = vmatpush.bf16.msra.mxu0 0
    %61 = vmatpush.bf16.msra.mxu0 0
    %62 = vmatpush.bf16.msra.mxu0 0
    %63 = vmatpush.bf16.msra.mxu0 0
    %64 = vmatpush.bf16.msra.mxu0 0
    %65 = vmatpush.bf16.msra.mxu0 0
    %66 = vmatpush.bf16.msra.mxu0 0
    %67 = vmatpush.bf16.msra.mxu0 %v54
    %68 = vmatmul.bf16.gmra.mxu0 %v58
    %v69 = vpop.f32.mrf.mxu0
    %v70 = vadd.f32 %v43, %v69
    %v71 = vpop.f32.mrf.mxu0
    %v72 = vadd.f32 %v43, %v71
    %73 = vdwg.mxu0
    %v74 = vmax.f32 %v70, 0.0
    %v75 = vmax.f32 %v72, 0.0
    %v76 = vpack.c.bf16 %v75, %v74
    %v77 = vld [vmem:[#allocation2] sm:$0xf]
    %v78 = vld [vmem:[#allocation2 + $0x4] sm:$0xf]
    %v79 = vld [vmem:[#allocation2 + $0x8] sm:$0xf]
    %v80 = vld [vmem:[#allocation2 + $0xc] sm:$0xf]
    %v81 = vld [vmem:[%s4] sm:$0x1]
    %v83 = vperm.slane %v81, 0
    %v89 = vunpack.c.l.b16 %v77
    %v90 = vunpack.c.l.b16 %v78
    %v91 = vunpack.c.l.b16 %v79
    %v92 = vunpack.c.l.b16 %v80
    %v93 = vpack.c.b16 %v90, %v89
    %v94 = vpack.c.b16 %v92, %v91
    %vm97 = vcmask 261120
    %v99 = vsel %vm97, %v76, 0
    %101 = vmatpush.bf16.msra.mxu0 0
    %102 = vmatpush.bf16.msra.mxu0 0
    %103 = vmatpush.bf16.msra.mxu0 0
    %104 = vmatpush.bf16.msra.mxu0 0
    %105 = vmatpush.bf16.msra.mxu0 0
    %106 = vmatpush.bf16.msra.mxu0 0
    %107 = vmatpush.bf16.msra.mxu0 %v94
    %108 = vmatpush.bf16.msra.mxu0 %v93
    %109 = vmatmul.bf16.gmra.mxu0 %v99
    %v110 = vpop.f32.mrf.mxu0
    %v111 = vadd.f32 %v83, %v110
    %v112 = vpop.f32.mrf.mxu0
    %v113 = vadd.f32 %v83, %v112
    %114 = vdwg.mxu0
    %v115 = vpack.c.bf16 %v111, %v111
    %v116 = vpack.c.bf16 %v113, %v113
    %117 = vst [vmem:[%s5] sm:$0xf] %v115
    %118 = vst [vmem:[%s5 + $0x4] sm:$0xf] %v116
    // Predicated region
    $region26: #{routing_forward.1} parent=1 // pred_check
      _
    $region27: #{routing_forward.1} parent=1 // pred_check_branch
      %120 = sbr.rel (0) target = $region29
    $region28: #{routing_forward.1} parent=1 // pred_region
      _
    $region29: #{routing_forward.1} parent=1 // pred_fallthru
      _
    // Predicated region
    $region30: #{routing_forward.1} parent=1 // pred_check
      _
    $region31: #{routing_forward.1} parent=1 // pred_check_branch
      %122 = sbr.rel (0) target = $region33
    $region32: #{routing_forward.1} parent=1 // pred_region
      _
    $region33: #{routing_forward.1} parent=1 // pred_fallthru
      _
    %123 = vsyncpa [#allocation3], 1

</llo_original>
